<compile_context>
chip_gen: v7x
topology: tpu7x:2x2x1
jax: 0.10.0
libtpu: 0.0.40
codegen_flags: <defaults>
</compile_context>

<pallas_src>
import math

import jax
import jax.numpy as jnp
from jax import lax
from jax.experimental import pallas as pl
from jax.experimental.pallas import tpu as pltpu


def _make_kernel(num_heads, head_dim):
    H, D = num_heads, head_dim
    QTR = D // 4  # quarter: rotate_half swaps quarters within each D/2 half

    def kernel(h_ref, w_ref, b_ref, cos_ref, sina_ref, sinb_ref, mask_ref,
               out_ref):
        # Fused Q/K/V projection for all heads: one wide bf16 MXU matmul.
        x = h_ref[0].astype(jnp.bfloat16)                    # (N, C)
        qkv = jnp.dot(x, w_ref[...],                         # (N, 3*H*D) f32
                      preferred_element_type=jnp.float32) + b_ref[...]

        cos = cos_ref[0]                                     # (N, D) f32
        sina = sina_ref[0]                                   # signed/zeroed sin
        sinb = sinb_ref[0]
        m = mask_ref[...]                                    # (N, N) f32

        def rope(t):
            # t*cos + rotate_half(t)*sin.  rotate_half (quarter swap within
            # each half + sign flip) = two XLU lane rolls; the sign and the
            # "which quarter" selection are baked into the sina/sinb tables.
            return (t * cos
                    + pltpu.roll(t, 3 * QTR, axis=1) * sina
                    + pltpu.roll(t, QTR, axis=1) * sinb)

        outs = []
        for hh in range(H):                                  # static unroll
            q = rope(qkv[:, hh * D:(hh + 1) * D])            # scale in Wq
            k = rope(qkv[:, (H + hh) * D:(H + hh + 1) * D])
            v = qkv[:, (2 * H + hh) * D:(2 * H + hh + 1) * D]

            # score[v,u] = exp(clamp(Q[v].K[u]/sqrt(D), -5, 5)) * mask[v,u]
            s = lax.dot_general(q.astype(jnp.bfloat16), k.astype(jnp.bfloat16),
                                (((1,), (1,)), ((), ())),
                                preferred_element_type=jnp.float32)  # (N, N)
            e = jnp.exp(jnp.clip(s, -5.0, 5.0)) * m
            z = jnp.sum(e, axis=-1, keepdims=True)                    # (N, 1)
            wV = jnp.dot(e.astype(jnp.bfloat16), v.astype(jnp.bfloat16),
                         preferred_element_type=jnp.float32)          # (N, D)
            # NOTE: matches the PyTorch/DGL module: an isolated node (all-zero
            # mask row) gives z == 0 -> inf/nan, exactly like sum-reduce there.
            outs.append(wV * pl.reciprocal(z, approx=True))

        # Single lane-dense store in 'b n (h d)' layout.
        out_ref[0] = jnp.concatenate(outs, axis=-1)          # (N, H*D)

    return kernel


def _rotary_tables(pos, head_dim, min_freq, scale):
    """cos / signed-sin tables of shape (B, N, D) for the in-kernel rolls.

    Layout per head dim D (quarters Q0..Q3, first half <- pos_x, second <- pos_y):
      out = t*cos + roll(t, 3*D/4)*sina + roll(t, D/4)*sinb
    reproduces apply_2d_rotary_pos_emb exactly.
    """
    D = head_dim
    rot_dim = D // 2                      # RotaryEmbedding(dim = out_dim // 2)
    inv_freq = 1.0 / (10000.0 ** (jnp.arange(0, rot_dim, 2, dtype=jnp.float32)
                                  / rot_dim))                 # (D//4,)

    def f_for(coord):                     # (B, N) -> (B, N, D//4)
        return (coord * (scale / min_freq))[..., None] * inv_freq

    fx = f_for(pos[..., 0])
    fy = f_for(pos[..., 1])
    zeros = jnp.zeros_like(fx)
    cos = jnp.concatenate([jnp.cos(fx), jnp.cos(fx),
                           jnp.cos(fy), jnp.cos(fy)], axis=-1)        # (B,N,D)
    # roll(t, 3*D/4) brings t[Q1]->Q0 and t[Q3]->Q2 (needs -sin there).
    sina = jnp.concatenate([-jnp.sin(fx), zeros, -jnp.sin(fy), zeros], axis=-1)
    # roll(t,   D/4) brings t[Q0]->Q1 and t[Q2]->Q3 (needs +sin there).
    sinb = jnp.concatenate([zeros, jnp.sin(fx), zeros, jnp.sin(fy)], axis=-1)
    return cos, sina, sinb


def multi_head_attention_graph(h, pos, adj_mask, params, *, num_heads, out_dim,
                               min_freq=1.0 / 64.0, scale=1.0):
    B, N, C = h.shape
    H, D = num_heads, out_dim
    HD = H * D

    # Fuse weights/biases: [Wq/sqrt(D) | Wk | Wv] -> (C, 3*H*D) bf16.
    inv_sqrt_d = 1.0 / math.sqrt(D)
    w_fused = jnp.concatenate([params["Wq"] * inv_sqrt_d,
                               params["Wk"], params["Wv"]],
                              axis=1).astype(jnp.bfloat16)            # (C,3HD)
    b_fused = jnp.concatenate([params["bq"] * inv_sqrt_d,
                               params["bk"], params["bv"]]
                              ).reshape(1, 3 * HD).astype(jnp.float32)

    cos, sina, sinb = _rotary_tables(pos, D, min_freq, scale)         # (B,N,D)

    # TODO(synk): for realistic graph sizes, tile the (N, N) score/mask block
    # flash-style (running z/wV accumulators, int8/bf16 mask) so it fits v7x's
    # 64 MiB VMEM; at N=16 the dense block is a few KB so no tiling is needed.
    return pl.pallas_call(
        _make_kernel(H, D),
        out_shape=jax.ShapeDtypeStruct((B, N, HD), jnp.float32),
        grid_spec=pltpu.PrefetchScalarGridSpec(
            num_scalar_prefetch=0,
            grid=(B,),
            in_specs=[
                pl.BlockSpec((1, N, C), lambda b: (b, 0, 0)),     # h
                pl.BlockSpec((C, 3 * HD), lambda b: (0, 0)),      # fused W
                pl.BlockSpec((1, 3 * HD), lambda b: (0, 0)),      # fused bias
                pl.BlockSpec((1, N, D), lambda b: (b, 0, 0)),     # cos
                pl.BlockSpec((1, N, D), lambda b: (b, 0, 0)),     # sinA
                pl.BlockSpec((1, N, D), lambda b: (b, 0, 0)),     # sinB
                pl.BlockSpec((N, N), lambda b: (0, 0)),           # adjacency
            ],
            out_specs=pl.BlockSpec((1, N, HD), lambda b: (b, 0, 0)),
        ),
        compiler_params=pltpu.CompilerParams(
            dimension_semantics=("parallel",)),
    )(h, w_fused, b_fused, cos, sina, sinb, adj_mask)


def reference_forward(h, pos, adj_mask, params, H, D, min_freq, scale):
    """Pure-JAX f32 reference matching the PyTorch module (relative_emb, dim=2)."""
    B, N, C = h.shape
    Qh = h @ params["Wq"] + params["bq"]
    Kh = h @ params["Wk"] + params["bk"]
    Vh = h @ params["Wv"] + params["bv"]

    def to_bhnd(x):
        return x.reshape(B, N, H, D).transpose(0, 2, 1, 3)

    Qh, Kh, Vh = map(to_bhnd, (Qh, Kh, Vh))

    rot_dim = D // 2
    inv_freq = 1.0 / (10000.0 ** (jnp.arange(0, rot_dim, 2, dtype=jnp.float32)
                                  / rot_dim))

    def freqs_for(coord):
        t = coord * (scale / min_freq)
        f = t[..., None] * inv_freq
        return jnp.concatenate([f, f], axis=-1)

    fx = freqs_for(pos[..., 0])[:, None]     # (B, 1, N, rot_dim)
    fy = freqs_for(pos[..., 1])[:, None]

    def rot_half(x):
        d = x.shape[-1]
        return jnp.concatenate([-x[..., d // 2:], x[..., :d // 2]], axis=-1)

    def apply_rot(t, f):
        return t * jnp.cos(f) + rot_half(t) * jnp.sin(f)

    def apply_2d(t):
        tx, ty = t[..., :D // 2], t[..., D // 2:]
        return jnp.concatenate([apply_rot(tx, fx), apply_rot(ty, fy)], axis=-1)

    Qh = apply_2d(Qh)
    Kh = apply_2d(Kh)

    s = jnp.einsum('bhnd,bhmd->bhnm', Qh, Kh) / jnp.sqrt(jnp.float32(D))
    e = jnp.exp(jnp.clip(s, -5.0, 5.0)) * adj_mask[None, None]
    z = e.sum(-1, keepdims=True)
    wV = jnp.einsum('bhnm,bhmd->bhnd', e, Vh)
    out = wV / z
    return out.transpose(0, 2, 1, 3).reshape(B, N, H * D)


if __name__ == "__main__":
    B, N, C = 2, 16, 32          # batch, nodes, in_dim
    H, D = 2, 128                # num_heads, out_dim (128 -> native lane width)
    min_freq, scale = 1.0 / 64.0, 1.0

    key = jax.random.PRNGKey(0)
    k1, k2, k3, k4, k5, k6, k7, k8 = jax.random.split(key, 8)
    params = {
        "Wq": jax.random.normal(k1, (C, H * D), jnp.float32) / jnp.sqrt(C),
        "Wk": jax.random.normal(k2, (C, H * D), jnp.float32) / jnp.sqrt(C),
        "Wv": jax.random.normal(k3, (C, H * D), jnp.float32) / jnp.sqrt(C),
        "bq": jax.random.normal(k4, (H * D,), jnp.float32) * 0.01,
        "bk": jax.random.normal(k5, (H * D,), jnp.float32) * 0.01,
        "bv": jax.random.normal(k6, (H * D,), jnp.float32) * 0.01,
    }
    h = jax.random.normal(k7, (B, N, C), jnp.float32)
    pos = jax.random.uniform(k8, (B, N, 2), jnp.float32)

    # Deterministic graph: self-loops plus a fixed sparse pattern.
    u = jnp.arange(N)[None, :]
    v = jnp.arange(N)[:, None]
    adj_mask = jnp.where(((u + 2 * v) % 3 == 0) | (u == v), 1.0, 0.0
                         ).astype(jnp.float32)   # adj_mask[v, u] = edge u -> v

    out = multi_head_attention_graph(h, pos, adj_mask, params,
                                     num_heads=H, out_dim=D,
                                     min_freq=min_freq, scale=scale)
    out = jax.block_until_ready(out)

    ref = reference_forward(h, pos, adj_mask, params, H, D, min_freq, scale)
    assert out.shape == (B, N, H * D)
    assert bool(jnp.all(jnp.isfinite(out)))
    # bf16 MXU operands (per perf review) -> slightly looser tolerance than f32.
    max_err = float(jnp.max(jnp.abs(out - ref)))
    assert bool(jnp.allclose(out, ref, rtol=5e-2, atol=5e-2)), max_err
    print("KERNEL_OK")
</pallas_src>

<mosaic_0001>
module attributes {stable_mosaic.version = 11 : i64} {
  func.func @kernel(%arg0: i32, %arg1: memref<1x16x32xf32, #tpu.memory_space<vmem>>, %arg2: memref<32x768xbf16, #tpu.memory_space<vmem>>, %arg3: memref<1x768xf32, #tpu.memory_space<vmem>>, %arg4: memref<1x16x128xf32, #tpu.memory_space<vmem>>, %arg5: memref<1x16x128xf32, #tpu.memory_space<vmem>>, %arg6: memref<1x16x128xf32, #tpu.memory_space<vmem>>, %arg7: memref<16x16xf32, #tpu.memory_space<vmem>>, %arg8: memref<1x16x256xf32, #tpu.memory_space<vmem>>) attributes {dimension_semantics = [#tpu.dimension_semantics<parallel>], iteration_bounds = array<i64: 2>, scalar_prefetch = 0 : i64, scratch_operands = 0 : i64, tpu.core_type = #tpu.core_type<tc>, window_params = [{transform_indices = @transform_0, window_bounds = array<i64: 1, 16, 32>}, {pipeline_mode = #tpu.pipeline_mode<synchronous>, transform_indices = @transform_1, window_bounds = array<i64: 32, 768>}, {pipeline_mode = #tpu.pipeline_mode<synchronous>, transform_indices = @transform_2, window_bounds = array<i64: 1, 768>}, {transform_indices = @transform_3, window_bounds = array<i64: 1, 16, 128>}, {transform_indices = @transform_4, window_bounds = array<i64: 1, 16, 128>}, {transform_indices = @transform_5, window_bounds = array<i64: 1, 16, 128>}, {pipeline_mode = #tpu.pipeline_mode<synchronous>, transform_indices = @transform_6, window_bounds = array<i64: 16, 16>}, {transform_indices = @transform_7, window_bounds = array<i64: 1, 16, 256>}]} {
    %c0 = arith.constant 0 : index
    %c0_0 = arith.constant 0 : index
    %c0_1 = arith.constant 0 : index
    %0 = vector.load %arg1[%c0, %c0_0, %c0_1] : memref<1x16x32xf32, #tpu.memory_space<vmem>>, vector<1x16x32xf32>
    %1 = vector.shape_cast %0 : vector<1x16x32xf32> to vector<16x32xf32>
    %2 = arith.truncf %1 : vector<16x32xf32> to vector<16x32xbf16>
    %c0_2 = arith.constant 0 : index
    %c0_3 = arith.constant 0 : index
    %3 = vector.load %arg2[%c0_2, %c0_3] : memref<32x768xbf16, #tpu.memory_space<vmem>>, vector<32x768xbf16>
    %cst = arith.constant dense<0.000000e+00> : vector<16x768xf32>
    %4 = tpu.matmul %2, %3, %cst {dimension_numbers = #tpu.dot_dimension_numbers<[1], [0], [0], [1], [0, 0, 1, 1], [], []>} : vector<16x32xbf16>, vector<32x768xbf16>, vector<16x768xf32> -> vector<16x768xf32>
    %c0_4 = arith.constant 0 : index
    %c0_5 = arith.constant 0 : index
    %5 = vector.load %arg3[%c0_4, %c0_5] : memref<1x768xf32, #tpu.memory_space<vmem>>, vector<1x768xf32>
    %6 = vector.broadcast %5 : vector<1x768xf32> to vector<16x768xf32>
    %7 = arith.addf %4, %6 : vector<16x768xf32>
    %c0_6 = arith.constant 0 : index
    %c0_7 = arith.constant 0 : index
    %c0_8 = arith.constant 0 : index
    %8 = vector.load %arg4[%c0_6, %c0_7, %c0_8] : memref<1x16x128xf32, #tpu.memory_space<vmem>>, vector<1x16x128xf32>
    %9 = vector.shape_cast %8 : vector<1x16x128xf32> to vector<16x128xf32>
    %c0_9 = arith.constant 0 : index
    %c0_10 = arith.constant 0 : index
    %c0_11 = arith.constant 0 : index
    %10 = vector.load %arg5[%c0_9, %c0_10, %c0_11] : memref<1x16x128xf32, #tpu.memory_space<vmem>>, vector<1x16x128xf32>
    %11 = vector.shape_cast %10 : vector<1x16x128xf32> to vector<16x128xf32>
    %c0_12 = arith.constant 0 : index
    %c0_13 = arith.constant 0 : index
    %c0_14 = arith.constant 0 : index
    %12 = vector.load %arg6[%c0_12, %c0_13, %c0_14] : memref<1x16x128xf32, #tpu.memory_space<vmem>>, vector<1x16x128xf32>
    %13 = vector.shape_cast %12 : vector<1x16x128xf32> to vector<16x128xf32>
    %c0_15 = arith.constant 0 : index
    %c0_16 = arith.constant 0 : index
    %14 = vector.load %arg7[%c0_15, %c0_16] : memref<16x16xf32, #tpu.memory_space<vmem>>, vector<16x16xf32>
    %15 = vector.extract_strided_slice %7 {offsets = [0, 0], sizes = [16, 128], strides = [1, 1]} : vector<16x768xf32> to vector<16x128xf32>
    %16 = arith.mulf %15, %9 : vector<16x128xf32>
    %c96_i32 = arith.constant 96 : i32
    %17 = tpu.dynamic_rotate %15 by %c96_i32 dim 1 : vector<16x128xf32>, i32 -> vector<16x128xf32>
    %18 = arith.mulf %17, %11 : vector<16x128xf32>
    %19 = arith.addf %16, %18 : vector<16x128xf32>
    %c32_i32 = arith.constant 32 : i32
    %20 = tpu.dynamic_rotate %15 by %c32_i32 dim 1 : vector<16x128xf32>, i32 -> vector<16x128xf32>
    %21 = arith.mulf %20, %13 : vector<16x128xf32>
    %22 = arith.addf %19, %21 : vector<16x128xf32>
    %23 = vector.extract_strided_slice %7 {offsets = [0, 256], sizes = [16, 128], strides = [1, 1]} : vector<16x768xf32> to vector<16x128xf32>
    %24 = arith.mulf %23, %9 : vector<16x128xf32>
    %c96_i32_17 = arith.constant 96 : i32
    %25 = tpu.dynamic_rotate %23 by %c96_i32_17 dim 1 : vector<16x128xf32>, i32 -> vector<16x128xf32>
    %26 = arith.mulf %25, %11 : vector<16x128xf32>
    %27 = arith.addf %24, %26 : vector<16x128xf32>
    %c32_i32_18 = arith.constant 32 : i32
    %28 = tpu.dynamic_rotate %23 by %c32_i32_18 dim 1 : vector<16x128xf32>, i32 -> vector<16x128xf32>
    %29 = arith.mulf %28, %13 : vector<16x128xf32>
    %30 = arith.addf %27, %29 : vector<16x128xf32>
    %31 = vector.extract_strided_slice %7 {offsets = [0, 512], sizes = [16, 128], strides = [1, 1]} : vector<16x768xf32> to vector<16x128xf32>
    %32 = arith.truncf %22 : vector<16x128xf32> to vector<16x128xbf16>
    %33 = arith.truncf %30 : vector<16x128xf32> to vector<16x128xbf16>
    %cst_19 = arith.constant dense<0.000000e+00> : vector<16x16xf32>
    %34 = tpu.matmul %32, %33, %cst_19 {dimension_numbers = #tpu.dot_dimension_numbers<[1], [1], [0], [0], [0, 0, 1, 0], [], []>} : vector<16x128xbf16>, vector<16x128xbf16>, vector<16x16xf32> -> vector<16x16xf32>
    %cst_20 = arith.constant -5.000000e+00 : f32
    %cst_21 = arith.constant 5.000000e+00 : f32
    %35 = vector.broadcast %cst_20 : f32 to vector<16x16xf32>
    %36 = arith.maximumf %35, %34 : vector<16x16xf32>
    %37 = vector.broadcast %cst_21 : f32 to vector<16x16xf32>
    %38 = arith.minimumf %37, %36 : vector<16x16xf32>
    %39 = math.exp %38 : vector<16x16xf32>
    %40 = arith.mulf %39, %14 : vector<16x16xf32>
    %cst_22 = arith.constant dense<0.000000e+00> : vector<16xf32>
    %41 = vector.multi_reduction <add>, %40, %cst_22 [1] : vector<16x16xf32> to vector<16xf32>
    %42 = vector.shape_cast %41 : vector<16xf32> to vector<16x1xf32>
    %43 = arith.truncf %40 : vector<16x16xf32> to vector<16x16xbf16>
    %44 = arith.truncf %31 : vector<16x128xf32> to vector<16x128xbf16>
    %cst_23 = arith.constant dense<0.000000e+00> : vector<16x128xf32>
    %45 = tpu.matmul %43, %44, %cst_23 {dimension_numbers = #tpu.dot_dimension_numbers<[1], [0], [0], [1], [0, 0, 1, 1], [], []>} : vector<16x16xbf16>, vector<16x128xbf16>, vector<16x128xf32> -> vector<16x128xf32>
    %46 = tpu.reciprocal %42 {approx = true} : vector<16x1xf32> -> vector<16x1xf32>
    %47 = vector.broadcast %46 : vector<16x1xf32> to vector<16x128xf32>
    %48 = arith.mulf %45, %47 : vector<16x128xf32>
    %49 = vector.extract_strided_slice %7 {offsets = [0, 128], sizes = [16, 128], strides = [1, 1]} : vector<16x768xf32> to vector<16x128xf32>
    %50 = arith.mulf %49, %9 : vector<16x128xf32>
    %c96_i32_24 = arith.constant 96 : i32
    %51 = tpu.dynamic_rotate %49 by %c96_i32_24 dim 1 : vector<16x128xf32>, i32 -> vector<16x128xf32>
    %52 = arith.mulf %51, %11 : vector<16x128xf32>
    %53 = arith.addf %50, %52 : vector<16x128xf32>
    %c32_i32_25 = arith.constant 32 : i32
    %54 = tpu.dynamic_rotate %49 by %c32_i32_25 dim 1 : vector<16x128xf32>, i32 -> vector<16x128xf32>
    %55 = arith.mulf %54, %13 : vector<16x128xf32>
    %56 = arith.addf %53, %55 : vector<16x128xf32>
    %57 = vector.extract_strided_slice %7 {offsets = [0, 384], sizes = [16, 128], strides = [1, 1]} : vector<16x768xf32> to vector<16x128xf32>
    %58 = arith.mulf %57, %9 : vector<16x128xf32>
    %c96_i32_26 = arith.constant 96 : i32
    %59 = tpu.dynamic_rotate %57 by %c96_i32_26 dim 1 : vector<16x128xf32>, i32 -> vector<16x128xf32>
    %60 = arith.mulf %59, %11 : vector<16x128xf32>
    %61 = arith.addf %58, %60 : vector<16x128xf32>
    %c32_i32_27 = arith.constant 32 : i32
    %62 = tpu.dynamic_rotate %57 by %c32_i32_27 dim 1 : vector<16x128xf32>, i32 -> vector<16x128xf32>
    %63 = arith.mulf %62, %13 : vector<16x128xf32>
    %64 = arith.addf %61, %63 : vector<16x128xf32>
    %65 = vector.extract_strided_slice %7 {offsets = [0, 640], sizes = [16, 128], strides = [1, 1]} : vector<16x768xf32> to vector<16x128xf32>
    %66 = arith.truncf %56 : vector<16x128xf32> to vector<16x128xbf16>
    %67 = arith.truncf %64 : vector<16x128xf32> to vector<16x128xbf16>
    %cst_28 = arith.constant dense<0.000000e+00> : vector<16x16xf32>
    %68 = tpu.matmul %66, %67, %cst_28 {dimension_numbers = #tpu.dot_dimension_numbers<[1], [1], [0], [0], [0, 0, 1, 0], [], []>} : vector<16x128xbf16>, vector<16x128xbf16>, vector<16x16xf32> -> vector<16x16xf32>
    %cst_29 = arith.constant -5.000000e+00 : f32
    %cst_30 = arith.constant 5.000000e+00 : f32
    %69 = vector.broadcast %cst_29 : f32 to vector<16x16xf32>
    %70 = arith.maximumf %69, %68 : vector<16x16xf32>
    %71 = vector.broadcast %cst_30 : f32 to vector<16x16xf32>
    %72 = arith.minimumf %71, %70 : vector<16x16xf32>
    %73 = math.exp %72 : vector<16x16xf32>
    %74 = arith.mulf %73, %14 : vector<16x16xf32>
    %cst_31 = arith.constant dense<0.000000e+00> : vector<16xf32>
    %75 = vector.multi_reduction <add>, %74, %cst_31 [1] : vector<16x16xf32> to vector<16xf32>
    %76 = vector.shape_cast %75 : vector<16xf32> to vector<16x1xf32>
    %77 = arith.truncf %74 : vector<16x16xf32> to vector<16x16xbf16>
    %78 = arith.truncf %65 : vector<16x128xf32> to vector<16x128xbf16>
    %cst_32 = arith.constant dense<0.000000e+00> : vector<16x128xf32>
    %79 = tpu.matmul %77, %78, %cst_32 {dimension_numbers = #tpu.dot_dimension_numbers<[1], [0], [0], [1], [0, 0, 1, 1], [], []>} : vector<16x16xbf16>, vector<16x128xbf16>, vector<16x128xf32> -> vector<16x128xf32>
    %80 = tpu.reciprocal %76 {approx = true} : vector<16x1xf32> -> vector<16x1xf32>
    %81 = vector.broadcast %80 : vector<16x1xf32> to vector<16x128xf32>
    %82 = arith.mulf %79, %81 : vector<16x128xf32>
    %83 = tpu.concatenate %48, %82 in 1 : vector<16x128xf32>, vector<16x128xf32> -> vector<16x256xf32>
    %c0_33 = arith.constant 0 : index
    %c0_34 = arith.constant 0 : index
    %c0_35 = arith.constant 0 : index
    %84 = vector.load %arg8[%c0_33, %c0_34, %c0_35] : memref<1x16x256xf32, #tpu.memory_space<vmem>>, vector<1x16x256xf32>
    %85 = vector.shape_cast %84 : vector<1x16x256xf32> to vector<16x256xf32>
    %86 = vector.shape_cast %83 : vector<16x256xf32> to vector<1x16x256xf32>
    tpu.vector_store %arg8[%c0_33, %c0_34, %c0_35], %86 {strides = array<i32>} : memref<1x16x256xf32, #tpu.memory_space<vmem>>, vector<1x16x256xf32>,
    return
  }
  func.func @transform_0(%arg0: i32) -> (i32, i32, i32) {
    %c0_i32 = arith.constant 0 : i32
    %c0_i32_0 = arith.constant 0 : i32
    %c0_i32_1 = arith.constant 0 : i32
    return %arg0, %c0_i32, %c0_i32_0 : i32, i32, i32
  }
  func.func @transform_1(%arg0: i32) -> (i32, i32) {
    %c0_i32 = arith.constant 0 : i32
    %c0_i32_0 = arith.constant 0 : i32
    %c0_i32_1 = arith.constant 0 : i32
    return %c0_i32, %c0_i32_0 : i32, i32
  }
  func.func @transform_2(%arg0: i32) -> (i32, i32) {
    %c0_i32 = arith.constant 0 : i32
    %c0_i32_0 = arith.constant 0 : i32
    %c0_i32_1 = arith.constant 0 : i32
    return %c0_i32, %c0_i32_0 : i32, i32
  }
  func.func @transform_3(%arg0: i32) -> (i32, i32, i32) {
    %c0_i32 = arith.constant 0 : i32
    %c0_i32_0 = arith.constant 0 : i32
    %c0_i32_1 = arith.constant 0 : i32
    return %arg0, %c0_i32, %c0_i32_0 : i32, i32, i32
  }
  func.func @transform_4(%arg0: i32) -> (i32, i32, i32) {
    %c0_i32 = arith.constant 0 : i32
    %c0_i32_0 = arith.constant 0 : i32
    %c0_i32_1 = arith.constant 0 : i32
    return %arg0, %c0_i32, %c0_i32_0 : i32, i32, i32
  }
  func.func @transform_5(%arg0: i32) -> (i32, i32, i32) {
    %c0_i32 = arith.constant 0 : i32
    %c0_i32_0 = arith.constant 0 : i32
    %c0_i32_1 = arith.constant 0 : i32
    return %arg0, %c0_i32, %c0_i32_0 : i32, i32, i32
  }
  func.func @transform_6(%arg0: i32) -> (i32, i32) {
    %c0_i32 = arith.constant 0 : i32
    %c0_i32_0 = arith.constant 0 : i32
    %c0_i32_1 = arith.constant 0 : i32
    return %c0_i32, %c0_i32_0 : i32, i32
  }
  func.func @transform_7(%arg0: i32) -> (i32, i32, i32) {
    %c0_i32 = arith.constant 0 : i32
    %c0_i32_0 = arith.constant 0 : i32
    %c0_i32_1 = arith.constant 0 : i32
    return %arg0, %c0_i32, %c0_i32_0 : i32, i32, i32
  }
}

</mosaic_0001>

<llo_original>
// kernel: tpu_custom_call.1
$region0: #{tpu_custom_call.1}
  #allocation0 [shape = 'u32[]', space=smem, size = 0x4, offset = 0x4, fixed_abs, tag = 'smem constant byte address 0x4 - core index']
  #allocation1 [shape = 'u32[144,128]{1,0:T(1,128)}', space=vmem, size = 0x12000, scoped, tag = 'internal scratch']
  %s0 = inlined_call_operand.hbm [shape: f32[2,16,32], index: 0, kind: input, shape index: {}]
  %s1 = inlined_call_operand.hbm [shape: bf16[32,768], index: 1, kind: input, shape index: {}]
  %s2 = inlined_call_operand.vmem [shape: f32[1,768], index: 2, kind: input, shape index: {}]
  %s3 = inlined_call_operand.hbm [shape: f32[2,16,128], index: 3, kind: input, shape index: {}]
  %s4 = inlined_call_operand.hbm [shape: f32[2,16,128], index: 4, kind: input, shape index: {}]
  %s5 = inlined_call_operand.hbm [shape: f32[2,16,128], index: 5, kind: input, shape index: {}]
  %s6 = inlined_call_operand.vmem [shape: f32[16,16], index: 6, kind: input, shape index: {}]
  %s7 = inlined_call_operand.hbm [shape: f32[2,16,256], index: 7, kind: output, shape index: {}]
  %s8 = sld [smem:[#allocation0]]
  $region81: #{tpu_custom_call.1} parent=0
    _
  %s10 = ssub.s32 1, %s8
  %s11 = scalar_select 0, %s10, %s8
  $region1: #{tpu_custom_call.1} parent=0
    #allocation2 [shape = 'u8[16384]{0}', space=vmem, size = 0x4000, scoped, tag = 'input window, operand 0']
    #allocation3 [shape = 's32[2]{0}', space=sflag, size = 0x8, scoped, tag = 'scoped memory for tpu_custom_call.1']
    #allocation4 [shape = 's32[2]{0}', space=sflag, size = 0x8, scoped, tag = 'scoped memory for tpu_custom_call.1']
    #allocation5 [shape = 'u8[49152]{0}', space=vmem, size = 0xc000, scoped, tag = 'input window, operand 1, single buffered']
    #allocation6 [shape = 's32[1]{0}', space=sflag, size = 0x4, scoped, tag = 'scoped memory for tpu_custom_call.1']
    #allocation7 [shape = 'u8[16384]{0}', space=vmem, size = 0x4000, scoped, tag = 'input window, operand 3']
    #allocation8 [shape = 'u8[16384]{0}', space=vmem, size = 0x4000, scoped, tag = 'input window, operand 4']
    #allocation9 [shape = 'u8[16384]{0}', space=vmem, size = 0x4000, scoped, tag = 'input window, operand 5']
    #allocation10 [shape = 'u8[32768]{0}', space=vmem, size = 0x8000, scoped, tag = 'output window, operand 0']
    %12 = vsyncpa [#allocation3], 0
    %s13 = scalar_lea.sflag [#allocation3], 1
    %14 = vsyncpa %s13, 0
    %15 = vsyncpa [#allocation6], 0
    %16 = vsyncpa [#allocation4], 0
    %s17 = scalar_lea.sflag [#allocation4], 1
    %18 = vsyncpa %s17, 0
    loop: start=0, step=1, limit=4
    $region2: #{tpu_custom_call.1} parent=1 // loop_pre_header
      _
    $region3: #{tpu_custom_call.1} parent=1 // loop_header
      %s20 = sphi 0, %s24
      %p21 = scmp.ge.s32.totalorder %s20, 4
      %s30 = sphi 0, %s32
      %s33 = sphi 0, %s30
      %s34 = sphi 0, %s33
      %s50 = sphi 0, %s34
      %s54 = sphi 0, %s54
      %s56 = sphi 0, %s54
      %s57 = sphi 0, %s56
      %s71 = sphi 0, %s57
      %s75 = sphi 0, %s75
      %s77 = sphi 0, %s75
      %s78 = sphi 0, %s77
      %s92 = sphi 0, %s78
      %s98 = sphi 0, %s100
      %s101 = sphi 0, %s98
      %s102 = sphi 0, %s101
      %s118 = sphi 0, %s102
      %s124 = sphi 0, %s126
      %s127 = sphi 0, %s124
      %s128 = sphi 0, %s127
      %s144 = sphi 0, %s128
      %s150 = sphi 0, %s152
      %s153 = sphi 0, %s150
      %s154 = sphi 0, %s153
      %s170 = sphi 0, %s154
      %s174 = sphi 0, %s174
      %s176 = sphi 0, %s174
      %s177 = sphi 0, %s176
      %s191 = sphi 0, %s177
      %s197 = sphi 0, %s199
      %s200 = sphi 0, %s197
      %s201 = sphi 0, %s200
      %s217 = sphi 0, %s201
    $region4: #{tpu_custom_call.1} parent=1 // loop_header_branch
      %23 = sbr.rel (%p21) target = $region8
    $region5: #{tpu_custom_call.1} parent=1 // loop_body
      %s25 = ssub.s32 %s20, 1
      %s26 = ssub.s32 %s20, 2
      %s27 = sadd.s32 %s20, 1
      %s28 = ssub.s32 %s20, %s27
      %p29 = scmp.eq.s32.totalorder %s28, 0
      %s31 = sadd.s32 %s30, 1
      %s32 = scalar_select %p29, %s30, %s31
      %p35 = pneg %p29
      %p36 = scmp.eq.s32.totalorder %s20, 1
      %p37 = por %p35, %p36
      %p38 = scmp.ne.s32.totalorder %s30, %s33
      %p39 = scmp.eq.s32.totalorder %s20, 0
      %p40 = por %p38, %p39
      %p41 = scmp.ne.s32.totalorder %s30, %s33
      %p42 = scmp.eq.s32.totalorder %s25, 1
      %p43 = por %p41, %p42
      %p44 = scmp.ne.s32.totalorder %s33, %s34
      %p45 = scmp.eq.s32.totalorder %s25, 0
      %p46 = por %p44, %p45
      %p47 = scmp.ne.s32.totalorder %s33, %s34
      %p48 = scmp.eq.s32.totalorder %s26, 1
      %p49 = por %p47, %p48
      %p51 = scmp.ne.s32.totalorder %s34, %s50
      %p52 = scmp.eq.s32.totalorder %s26, 0
      %p53 = por %p51, %p52
      %s55 = sadd.s32 %s54, 1
      %p58 = scmp.eq.s32.totalorder %s20, 1
      %p59 = scmp.ne.s32.totalorder %s54, %s56
      %p60 = scmp.eq.s32.totalorder %s20, 0
      %p61 = por %p59, %p60
      %p62 = scmp.ne.s32.totalorder %s54, %s56
      %p63 = scmp.eq.s32.totalorder %s25, 1
      %p64 = por %p62, %p63
      %p65 = scmp.ne.s32.totalorder %s56, %s57
      %p66 = scmp.eq.s32.totalorder %s25, 0
      %p67 = por %p65, %p66
      %p68 = scmp.ne.s32.totalorder %s56, %s57
      %p69 = scmp.eq.s32.totalorder %s26, 1
      %p70 = por %p68, %p69
      %p72 = scmp.ne.s32.totalorder %s57, %s71
      %p73 = scmp.eq.s32.totalorder %s26, 0
      %p74 = por %p72, %p73
      %s76 = sadd.s32 %s75, 1
      %p79 = scmp.eq.s32.totalorder %s20, 1
      %p80 = scmp.ne.s32.totalorder %s75, %s77
      %p81 = scmp.eq.s32.totalorder %s20, 0
      %p82 = por %p80, %p81
      %p83 = scmp.ne.s32.totalorder %s75, %s77
      %p84 = scmp.eq.s32.totalorder %s25, 1
      %p85 = por %p83, %p84
      %p86 = scmp.ne.s32.totalorder %s77, %s78
      %p87 = scmp.eq.s32.totalorder %s25, 0
      %p88 = por %p86, %p87
      %p89 = scmp.ne.s32.totalorder %s77, %s78
      %p90 = scmp.eq.s32.totalorder %s26, 1
      %p91 = por %p89, %p90
      %p93 = scmp.ne.s32.totalorder %s78, %s92
      %p94 = scmp.eq.s32.totalorder %s26, 0
      %p95 = por %p93, %p94
      %s96 = ssub.s32 %s20, %s27
      %p97 = scmp.eq.s32.totalorder %s96, 0
      %s99 = sadd.s32 %s98, 1
      %s100 = scalar_select %p97, %s98, %s99
      %p103 = pneg %p97
      %p104 = scmp.eq.s32.totalorder %s20, 1
      %p105 = por %p103, %p104
      %p106 = scmp.ne.s32.totalorder %s98, %s101
      %p107 = scmp.eq.s32.totalorder %s20, 0
      %p108 = por %p106, %p107
      %p109 = scmp.ne.s32.totalorder %s98, %s101
      %p110 = scmp.eq.s32.totalorder %s25, 1
      %p111 = por %p109, %p110
      %p112 = scmp.ne.s32.totalorder %s101, %s102
      %p113 = scmp.eq.s32.totalorder %s25, 0
      %p114 = por %p112, %p113
      %p115 = scmp.ne.s32.totalorder %s101, %s102
      %p116 = scmp.eq.s32.totalorder %s26, 1
      %p117 = por %p115, %p116
      %p119 = scmp.ne.s32.totalorder %s102, %s118
      %p120 = scmp.eq.s32.totalorder %s26, 0
      %p121 = por %p119, %p120
      %s122 = ssub.s32 %s20, %s27
      %p123 = scmp.eq.s32.totalorder %s122, 0
      %s125 = sadd.s32 %s124, 1
      %s126 = scalar_select %p123, %s124, %s125
      %p129 = pneg %p123
      %p130 = scmp.eq.s32.totalorder %s20, 1
      %p131 = por %p129, %p130
      %p132 = scmp.ne.s32.totalorder %s124, %s127
      %p133 = scmp.eq.s32.totalorder %s20, 0
      %p134 = por %p132, %p133
      %p135 = scmp.ne.s32.totalorder %s124, %s127
      %p136 = scmp.eq.s32.totalorder %s25, 1
      %p137 = por %p135, %p136
      %p138 = scmp.ne.s32.totalorder %s127, %s128
      %p139 = scmp.eq.s32.totalorder %s25, 0
      %p140 = por %p138, %p139
      %p141 = scmp.ne.s32.totalorder %s127, %s128
      %p142 = scmp.eq.s32.totalorder %s26, 1
      %p143 = por %p141, %p142
      %p145 = scmp.ne.s32.totalorder %s128, %s144
      %p146 = scmp.eq.s32.totalorder %s26, 0
      %p147 = por %p145, %p146
      %s148 = ssub.s32 %s20, %s27
      %p149 = scmp.eq.s32.totalorder %s148, 0
      %s151 = sadd.s32 %s150, 1
      %s152 = scalar_select %p149, %s150, %s151
      %p155 = pneg %p149
      %p156 = scmp.eq.s32.totalorder %s20, 1
      %p157 = por %p155, %p156
      %p158 = scmp.ne.s32.totalorder %s150, %s153
      %p159 = scmp.eq.s32.totalorder %s20, 0
      %p160 = por %p158, %p159
      %p161 = scmp.ne.s32.totalorder %s150, %s153
      %p162 = scmp.eq.s32.totalorder %s25, 1
      %p163 = por %p161, %p162
      %p164 = scmp.ne.s32.totalorder %s153, %s154
      %p165 = scmp.eq.s32.totalorder %s25, 0
      %p166 = por %p164, %p165
      %p167 = scmp.ne.s32.totalorder %s153, %s154
      %p168 = scmp.eq.s32.totalorder %s26, 1
      %p169 = por %p167, %p168
      %p171 = scmp.ne.s32.totalorder %s154, %s170
      %p172 = scmp.eq.s32.totalorder %s26, 0
      %p173 = por %p171, %p172
      %s175 = sadd.s32 %s174, 1
      %p178 = scmp.eq.s32.totalorder %s20, 1
      %p179 = scmp.ne.s32.totalorder %s174, %s176
      %p180 = scmp.eq.s32.totalorder %s20, 0
      %p181 = por %p179, %p180
      %p182 = scmp.ne.s32.totalorder %s174, %s176
      %p183 = scmp.eq.s32.totalorder %s25, 1
      %p184 = por %p182, %p183
      %p185 = scmp.ne.s32.totalorder %s176, %s177
      %p186 = scmp.eq.s32.totalorder %s25, 0
      %p187 = por %p185, %p186
      %p188 = scmp.ne.s32.totalorder %s176, %s177
      %p189 = scmp.eq.s32.totalorder %s26, 1
      %p190 = por %p188, %p189
      %p192 = scmp.ne.s32.totalorder %s177, %s191
      %p193 = scmp.eq.s32.totalorder %s26, 0
      %p194 = por %p192, %p193
      %s195 = ssub.s32 %s20, %s27
      %p196 = scmp.eq.s32.totalorder %s195, 0
      %s198 = sadd.s32 %s197, 1
      %s199 = scalar_select %p196, %s197, %s198
      %p202 = pneg %p196
      %p203 = scmp.eq.s32.totalorder %s20, 1
      %p204 = por %p202, %p203
      %p205 = scmp.ne.s32.totalorder %s197, %s200
      %p206 = scmp.eq.s32.totalorder %s20, 0
      %p207 = por %p205, %p206
      %p208 = scmp.ne.s32.totalorder %s197, %s200
      %p209 = scmp.eq.s32.totalorder %s25, 1
      %p210 = por %p208, %p209
      %p211 = scmp.ne.s32.totalorder %s200, %s201
      %p212 = scmp.eq.s32.totalorder %s25, 0
      %p213 = por %p211, %p212
      %p214 = scmp.ne.s32.totalorder %s200, %s201
      %p215 = scmp.eq.s32.totalorder %s26, 1
      %p216 = por %p214, %p215
      %p218 = scmp.ne.s32.totalorder %s201, %s217
      %p219 = scmp.eq.s32.totalorder %s26, 0
      %p220 = por %p218, %p219
      %p221 = scmp.le.s32.totalorder 1, %s20
      %p222 = scmp.lt.s32.totalorder %s20, 3
      %p223 = pnand %p221, %p222
      %p224 = pneg %p223
      // Predicated region
      $region9: #{tpu_custom_call.1} parent=5 // pred_check
        _
      $region10: #{tpu_custom_call.1} parent=5 // pred_check_branch
        %226 = sbr.rel (%p223) target = $region12
      $region11: #{tpu_custom_call.1} parent=5 // pred_region
        %s227 = ssub.s32 %s20, 1
        // Predicated region
        $region13: #{tpu_custom_call.1} parent=11 // pred_check
          %p228 = pneg %p67
        $region14: #{tpu_custom_call.1} parent=11 // pred_check_branch
          %230 = sbr.rel (%p228) target = $region16
        $region15: #{tpu_custom_call.1} parent=11 // pred_region
          %s232 = ssub.s32 1536, 1536
          %233 = vsyncadd [#allocation6], %s232
          %s234 = sshll.u32 [#allocation5], 4
          %s235 = int_to_ptr.vmem [resolvable:$true] %s234
          %240 = dma.hbm_to_vmem [thread:$0]  %s1, 1536, %s235, [#allocation6], 384, 384, 24
        $region16: #{tpu_custom_call.1} parent=11 // pred_fallthru
          _
        // Predicated region
        $region17: #{tpu_custom_call.1} parent=11 // pred_check
          %p241 = pneg %p88
        $region18: #{tpu_custom_call.1} parent=11 // pred_check_branch
          %243 = sbr.rel (%p241) target = $region20
        $region19: #{tpu_custom_call.1} parent=11 // pred_region
          _
        $region20: #{tpu_custom_call.1} parent=11 // pred_fallthru
          _
        // Predicated region
        $region21: #{tpu_custom_call.1} parent=11 // pred_check
          %p244 = pneg %p187
        $region22: #{tpu_custom_call.1} parent=11 // pred_check_branch
          %246 = sbr.rel (%p244) target = $region24
        $region23: #{tpu_custom_call.1} parent=11 // pred_region
          _
        $region24: #{tpu_custom_call.1} parent=11 // pred_fallthru
          _
      $region12: #{tpu_custom_call.1} parent=5 // pred_fallthru
        _
      %p247 = scmp.lt.s32.totalorder %s20, 2
      // Predicated region
      $region25: #{tpu_custom_call.1} parent=5 // pred_check
        %p248 = pneg %p247
      $region26: #{tpu_custom_call.1} parent=5 // pred_check_branch
        %250 = sbr.rel (%p248) target = $region28
      $region27: #{tpu_custom_call.1} parent=5 // pred_region
        // Predicated region
        $region29: #{tpu_custom_call.1} parent=27 // pred_check
          %p251 = pneg %p40
        $region30: #{tpu_custom_call.1} parent=27 // pred_check_branch
          %253 = sbr.rel (%p251) target = $region32
        $region31: #{tpu_custom_call.1} parent=27 // pred_region
          %s254 = sand.u32 %s20, 1
          %s255 = scalar_lea.sflag [#allocation3], %s254
          %s256 = sand.u32 %s30, 1
          %s257 = smul.addr %s256, 16
          %s258 = scalar_lea.vmem [#allocation2], %s257
          %s260 = ssub.s32 256, 256
          %261 = vsyncadd %s255, %s260
          %s262 = smul.addr %s20, 2
          %s263 = smul.addr %s262, 128
          %s264 = scalar_lea.hbm %s0, %s263
          %s265 = sshll.u32 %s258, 4
          %s266 = int_to_ptr.vmem [resolvable:$true] %s265
          %271 = dma.hbm_to_vmem [thread:$0]  %s264, 256, %s266, %s255, 128, 128, 8
        $region32: #{tpu_custom_call.1} parent=27 // pred_fallthru
          _
        // Predicated region
        $region33: #{tpu_custom_call.1} parent=27 // pred_check
          %p272 = pneg %p108
        $region34: #{tpu_custom_call.1} parent=27 // pred_check_branch
          %274 = sbr.rel (%p272) target = $region36
        $region35: #{tpu_custom_call.1} parent=27 // pred_region
          %s275 = sand.u32 %s20, 1
          %s276 = scalar_lea.sflag [#allocation3], %s275
          %s277 = sand.u32 %s98, 1
          %s278 = smul.addr %s277, 16
          %s279 = scalar_lea.vmem [#allocation7], %s278
          %s281 = ssub.s32 256, 256
          %282 = vsyncadd %s276, %s281
          %s283 = smul.addr %s20, 2
          %s284 = smul.addr %s283, 128
          %s285 = scalar_lea.hbm %s3, %s284
          %s286 = sshll.u32 %s279, 4
          %s287 = int_to_ptr.vmem [resolvable:$true] %s286
          %292 = dma.hbm_to_vmem [thread:$0]  %s285, 256, %s287, %s276, 128, 128, 8
        $region36: #{tpu_custom_call.1} parent=27 // pred_fallthru
          _
        // Predicated region
        $region37: #{tpu_custom_call.1} parent=27 // pred_check
          %p293 = pneg %p134
        $region38: #{tpu_custom_call.1} parent=27 // pred_check_branch
          %295 = sbr.rel (%p293) target = $region40
        $region39: #{tpu_custom_call.1} parent=27 // pred_region
          %s296 = sand.u32 %s20, 1
          %s297 = scalar_lea.sflag [#allocation3], %s296
          %s298 = sand.u32 %s124, 1
          %s299 = smul.addr %s298, 16
          %s300 = scalar_lea.vmem [#allocation8], %s299
          %s302 = ssub.s32 256, 256
          %303 = vsyncadd %s297, %s302
          %s304 = smul.addr %s20, 2
          %s305 = smul.addr %s304, 128
          %s306 = scalar_lea.hbm %s4, %s305
          %s307 = sshll.u32 %s300, 4
          %s308 = int_to_ptr.vmem [resolvable:$true] %s307
          %313 = dma.hbm_to_vmem [thread:$0]  %s306, 256, %s308, %s297, 128, 128, 8
        $region40: #{tpu_custom_call.1} parent=27 // pred_fallthru
          _
        // Predicated region
        $region41: #{tpu_custom_call.1} parent=27 // pred_check
          %p314 = pneg %p160
        $region42: #{tpu_custom_call.1} parent=27 // pred_check_branch
          %316 = sbr.rel (%p314) target = $region44
        $region43: #{tpu_custom_call.1} parent=27 // pred_region
          %s317 = sand.u32 %s20, 1
          %s318 = scalar_lea.sflag [#allocation3], %s317
          %s319 = sand.u32 %s150, 1
          %s320 = smul.addr %s319, 16
          %s321 = scalar_lea.vmem [#allocation9], %s320
          %s323 = ssub.s32 256, 256
          %324 = vsyncadd %s318, %s323
          %s325 = smul.addr %s20, 2
          %s326 = smul.addr %s325, 128
          %s327 = scalar_lea.hbm %s5, %s326
          %s328 = sshll.u32 %s321, 4
          %s329 = int_to_ptr.vmem [resolvable:$true] %s328
          %334 = dma.hbm_to_vmem [thread:$0]  %s327, 256, %s329, %s318, 128, 128, 8
        $region44: #{tpu_custom_call.1} parent=27 // pred_fallthru
          _
      $region28: #{tpu_custom_call.1} parent=5 // pred_fallthru
        _
      %p335 = scmp.le.s32.totalorder 1, %s20
      %p336 = scmp.lt.s32.totalorder %s20, 3
      %p337 = pnand %p335, %p336
      %p338 = pneg %p337
      // Predicated region
      $region45: #{tpu_custom_call.1} parent=5 // pred_check
        _
      $region46: #{tpu_custom_call.1} parent=5 // pred_check_branch
        %340 = sbr.rel (%p337) target = $region48
      $region47: #{tpu_custom_call.1} parent=5 // pred_region
        %s341 = ssub.s32 %s20, 1
        %s342 = sand.u32 %s25, 1
        %s343 = scalar_lea.sflag [#allocation3], %s342
        %s344 = sand.u32 %s33, 1
        %s345 = smul.addr %s344, 16
        %s346 = scalar_lea.vmem [#allocation2], %s345
        // Predicated region
        $region49: #{tpu_custom_call.1} parent=47 // pred_check
          %p347 = pneg %p46
        $region50: #{tpu_custom_call.1} parent=47 // pred_check_branch
          %349 = sbr.rel (%p347) target = $region52
        $region51: #{tpu_custom_call.1} parent=47 // pred_region
          %350 = dma.done %s343, 256
        $region52: #{tpu_custom_call.1} parent=47 // pred_fallthru
          _
        // Predicated region
        $region53: #{tpu_custom_call.1} parent=47 // pred_check
          %p351 = pneg %p67
        $region54: #{tpu_custom_call.1} parent=47 // pred_check_branch
          %353 = sbr.rel (%p351) target = $region56
        $region55: #{tpu_custom_call.1} parent=47 // pred_region
          %354 = dma.done [#allocation6], 1536
        $region56: #{tpu_custom_call.1} parent=47 // pred_fallthru
          _
        %s355 = sand.u32 %s25, 1
        %s356 = scalar_lea.sflag [#allocation3], %s355
        %s357 = sand.u32 %s101, 1
        %s358 = smul.addr %s357, 16
        %s359 = scalar_lea.vmem [#allocation7], %s358
        // Predicated region
        $region57: #{tpu_custom_call.1} parent=47 // pred_check
          %p360 = pneg %p114
        $region58: #{tpu_custom_call.1} parent=47 // pred_check_branch
          %362 = sbr.rel (%p360) target = $region60
        $region59: #{tpu_custom_call.1} parent=47 // pred_region
          %363 = dma.done %s356, 256
        $region60: #{tpu_custom_call.1} parent=47 // pred_fallthru
          _
        %s364 = sand.u32 %s25, 1
        %s365 = scalar_lea.sflag [#allocation3], %s364
        %s366 = sand.u32 %s127, 1
        %s367 = smul.addr %s366, 16
        %s368 = scalar_lea.vmem [#allocation8], %s367
        // Predicated region
        $region61: #{tpu_custom_call.1} parent=47 // pred_check
          %p369 = pneg %p140
        $region62: #{tpu_custom_call.1} parent=47 // pred_check_branch
          %371 = sbr.rel (%p369) target = $region64
        $region63: #{tpu_custom_call.1} parent=47 // pred_region
          %372 = dma.done %s365, 256
        $region64: #{tpu_custom_call.1} parent=47 // pred_fallthru
          _
        %s373 = sand.u32 %s25, 1
        %s374 = scalar_lea.sflag [#allocation3], %s373
        %s375 = sand.u32 %s153, 1
        %s376 = smul.addr %s375, 16
        %s377 = scalar_lea.vmem [#allocation9], %s376
        // Predicated region
        $region65: #{tpu_custom_call.1} parent=47 // pred_check
          %p378 = pneg %p166
        $region66: #{tpu_custom_call.1} parent=47 // pred_check_branch
          %380 = sbr.rel (%p378) target = $region68
        $region67: #{tpu_custom_call.1} parent=47 // pred_region
          %381 = dma.done %s374, 256
        $region68: #{tpu_custom_call.1} parent=47 // pred_fallthru
          _
        %s382 = sand.u32 %s25, 1
        %s383 = scalar_lea.sflag [#allocation3], %s382
        %s384 = sand.u32 %s33, 1
        %s385 = smul.addr %s384, 16
        %s386 = scalar_lea.vmem [#allocation2], %s385
        %p387 = pneg %p46
        %p388 = pneg %p43
        %p389 = pneg %p67
        %p390 = pneg %p64
        %p391 = pneg %p88
        %p392 = pneg %p85
        %s393 = sand.u32 %s25, 1
        %s394 = scalar_lea.sflag [#allocation3], %s393
        %s395 = sand.u32 %s101, 1
        %s396 = smul.addr %s395, 16
        %s397 = scalar_lea.vmem [#allocation7], %s396
        %p398 = pneg %p114
        %p399 = pneg %p111
        %s400 = sand.u32 %s25, 1
        %s401 = scalar_lea.sflag [#allocation3], %s400
        %s402 = sand.u32 %s127, 1
        %s403 = smul.addr %s402, 16
        %s404 = scalar_lea.vmem [#allocation8], %s403
        %p405 = pneg %p140
        %p406 = pneg %p137
        %s407 = sand.u32 %s25, 1
        %s408 = scalar_lea.sflag [#allocation3], %s407
        %s409 = sand.u32 %s153, 1
        %s410 = smul.addr %s409, 16
        %s411 = scalar_lea.vmem [#allocation9], %s410
        %p412 = pneg %p166
        %p413 = pneg %p163
        %p414 = pneg %p187
        %p415 = pneg %p184
        %p416 = pneg %p213
        %p417 = pneg %p210
        %s418 = sand.u32 %s200, 1
        %s419 = scalar_lea.sflag [#allocation4], %s418
        %s420 = sand.u32 %s200, 1
        %s421 = smul.addr %s420, 32
        %s422 = scalar_lea.vmem [#allocation10], %s421
        %v424 = vld [vmem:[%s346] sm:$0xff]
        %v425 = vld [vmem:[%s346 + $0x8] sm:$0xff]
        %v426 = vpack.c.bf16 %v425, %v424
        %v427 = vld [vmem:[#allocation5] sm:$0xff]
        %v428 = vld [vmem:[#allocation5 + $0x8] sm:$0xff]
        %v429 = vld [vmem:[#allocation5 + $0x10] sm:$0xff]
        %v430 = vld [vmem:[#allocation5 + $0x18] sm:$0xff]
        %v431 = vld [vmem:[#allocation5 + $0x20] sm:$0xff]
        %v432 = vld [vmem:[#allocation5 + $0x28] sm:$0xff]
        %v433 = vld [vmem:[#allocation5 + $0x30] sm:$0xff]
        %v434 = vld [vmem:[#allocation5 + $0x38] sm:$0xff]
        %v435 = vld [vmem:[#allocation5 + $0x40] sm:$0xff]
        %v436 = vld [vmem:[#allocation5 + $0x48] sm:$0xff]
        %v437 = vld [vmem:[#allocation5 + $0x50] sm:$0xff]
        %v438 = vld [vmem:[#allocation5 + $0x58] sm:$0xff]
        %v439 = vld [vmem:[%s2] sm:$0x3f]
        %v441 = vlaneseq
        %v442 = vshrl.u32 %v441, 7
        %v443 = vsub.s32 0, %v442
        %v444 = vrot.slane %v439, %v443
        %v445 = vlaneseq
        %v446 = vshrl.u32 %v445, 7
        %v447 = vsub.s32 1, %v446
        %v448 = vrot.slane %v439, %v447
        %v449 = vlaneseq
        %v450 = vshrl.u32 %v449, 7
        %v451 = vsub.s32 2, %v450
        %v452 = vrot.slane %v439, %v451
        %v453 = vlaneseq
        %v454 = vshrl.u32 %v453, 7
        %v455 = vsub.s32 3, %v454
        %v456 = vrot.slane %v439, %v455
        %v457 = vlaneseq
        %v458 = vshrl.u32 %v457, 7
        %v459 = vsub.s32 4, %v458
        %v460 = vrot.slane %v439, %v459
        %v461 = vlaneseq
        %v462 = vshrl.u32 %v461, 7
        %v463 = vsub.s32 5, %v462
        %v464 = vrot.slane %v439, %v463
        %v483 = vunpack.c.l.b16 %v427
        %v484 = vunpack.c.h.b16 %v427
        %v485 = vunpack.c.l.b16 %v428
        %v486 = vunpack.c.h.b16 %v428
        %v487 = vunpack.c.l.b16 %v429
        %v488 = vunpack.c.h.b16 %v429
        %v489 = vunpack.c.l.b16 %v430
        %v490 = vunpack.c.h.b16 %v430
        %v491 = vunpack.c.l.b16 %v431
        %v492 = vunpack.c.h.b16 %v431
        %v493 = vunpack.c.l.b16 %v432
        %v494 = vunpack.c.h.b16 %v432
        %v495 = vunpack.c.l.b16 %v433
        %v496 = vunpack.c.h.b16 %v433
        %v497 = vunpack.c.l.b16 %v434
        %v498 = vunpack.c.h.b16 %v434
        %v499 = vunpack.c.l.b16 %v435
        %v500 = vunpack.c.h.b16 %v435
        %v501 = vunpack.c.l.b16 %v436
        %v502 = vunpack.c.h.b16 %v436
        %v503 = vunpack.c.l.b16 %v437
        %v504 = vunpack.c.h.b16 %v437
        %v505 = vunpack.c.l.b16 %v438
        %v506 = vunpack.c.h.b16 %v438
        %v507 = vpack.c.b16 %v489, %v483
        %v508 = vpack.c.b16 %v490, %v484
        %v509 = vpack.c.b16 %v491, %v485
        %v510 = vpack.c.b16 %v492, %v486
        %v511 = vpack.c.b16 %v493, %v487
        %v512 = vpack.c.b16 %v494, %v488
        %v513 = vpack.c.b16 %v501, %v495
        %v514 = vpack.c.b16 %v502, %v496
        %v515 = vpack.c.b16 %v503, %v497
        %v516 = vpack.c.b16 %v504, %v498
        %v517 = vpack.c.b16 %v505, %v499
        %v518 = vpack.c.b16 %v506, %v500
        %vm531 = vcmask 261120
        %v533 = vsel %vm531, %v426, 0
        %535 = vmatprep.subr.bf16.mxu0 %v508
        %536 = vmatpush1.bf16.msra.mxu0 %v507
        %537 = vmatprep.subr.bf16.mxu0 %v514
        %538 = vmatpush1.bf16.msra.mxu0 %v513
        %539 = vmatprep.subr.bf16.mxu0 0
        %540 = vmatpush1.bf16.msra.mxu0 0
        %541 = vmatprep.subr.bf16.mxu0 0
        %542 = vmatpush1.bf16.msra.mxu0 0
        %543 = vmatprep.subr.bf16.mxu0 0
        %544 = vmatpush1.bf16.msra.mxu0 0
        %545 = vmatprep.subr.bf16.mxu0 0
        %546 = vmatpush1.bf16.msra.mxu0 0
        %547 = vmatprep.subr.bf16.mxu0 0
        %548 = vmatpush1.bf16.msra.mxu0 0
        %549 = vmatprep.subr.bf16.mxu0 0
        %550 = vmatpush1.bf16.msra.mxu0 0
        %551 = vmatprep.subr.bf16.mxu0 0
        %552 = vmatpush1.bf16.msra.mxu0 0
        %553 = vmatprep.subr.bf16.mxu0 0
        %554 = vmatpush1.bf16.msra.mxu0 0
        %555 = vmatprep.subr.bf16.mxu0 0
        %556 = vmatpush1.bf16.msra.mxu0 0
        %557 = vmatprep.subr.bf16.mxu0 0
        %558 = vmatpush1.bf16.msra.mxu0 0
        %559 = vmatprep.subr.bf16.mxu0 0
        %560 = vmatpush1.bf16.msra.mxu0 0
        %561 = vmatprep.subr.bf16.mxu0 0
        %562 = vmatpush1.bf16.msra.mxu0 0
        %563 = vmatprep.subr.bf16.mxu0 0
        %564 = vmatpush1.bf16.msra.mxu0 0
        %565 = vmatprep.subr.bf16.mxu0 0
        %566 = vmatpush1.bf16.msra.mxu0 0
        %567 = vmatprep.mubr.bf16.mxu0 0
        %568 = vmatmul.mubr.bf16.gmra.mrb[0].mxu0 %v533
        %v569 = vpop.f32.mrb[0].mxu0
        %v570 = vadd.f32 %v444, %v569
        %v571 = vpop.f32.mrb[0].mxu0
        %v572 = vadd.f32 %v448, %v571
        %v573 = vpop.f32.mrb[0].mxu0
        %v574 = vadd.f32 %v444, %v573
        %v575 = vpop.f32.mrb[0].mxu0
        %v576 = vadd.f32 %v448, %v575
        %577 = vdwg.mxu0
        %578 = vmatprep.subr.bf16.mxu0 %v510
        %579 = vmatpush1.bf16.msra.mxu0 %v509
        %580 = vmatprep.subr.bf16.mxu0 %v516
        %581 = vmatpush1.bf16.msra.mxu0 %v515
        %582 = vmatprep.subr.bf16.mxu0 0
        %583 = vmatpush1.bf16.msra.mxu0 0
        %584 = vmatprep.subr.bf16.mxu0 0
        %585 = vmatpush1.bf16.msra.mxu0 0
        %586 = vmatprep.subr.bf16.mxu0 0
        %587 = vmatpush1.bf16.msra.mxu0 0
        %588 = vmatprep.subr.bf16.mxu0 0
        %589 = vmatpush1.bf16.msra.mxu0 0
        %590 = vmatprep.subr.bf16.mxu0 0
        %591 = vmatpush1.bf16.msra.mxu0 0
        %592 = vmatprep.subr.bf16.mxu0 0
        %593 = vmatpush1.bf16.msra.mxu0 0
        %594 = vmatprep.subr.bf16.mxu0 0
        %595 = vmatpush1.bf16.msra.mxu0 0
        %596 = vmatprep.subr.bf16.mxu0 0
        %597 = vmatpush1.bf16.msra.mxu0 0
        %598 = vmatprep.subr.bf16.mxu0 0
        %599 = vmatpush1.bf16.msra.mxu0 0
        %600 = vmatprep.subr.bf16.mxu0 0
        %601 = vmatpush1.bf16.msra.mxu0 0
        %602 = vmatprep.subr.bf16.mxu0 0
        %603 = vmatpush1.bf16.msra.mxu0 0
        %604 = vmatprep.subr.bf16.mxu0 0
        %605 = vmatpush1.bf16.msra.mxu0 0
        %606 = vmatprep.subr.bf16.mxu0 0
        %607 = vmatpush1.bf16.msra.mxu0 0
        %608 = vmatprep.subr.bf16.mxu0 0
        %609 = vmatpush1.bf16.msra.mxu0 0
        %610 = vmatprep.mubr.bf16.mxu0 0
        %611 = vmatmul.mubr.bf16.gmra.mrb[0].mxu0 %v533
        %v612 = vpop.f32.mrb[0].mxu0
        %v613 = vadd.f32 %v452, %v612
        %v614 = vpop.f32.mrb[0].mxu0
        %v615 = vadd.f32 %v456, %v614
        %v616 = vpop.f32.mrb[0].mxu0
        %v617 = vadd.f32 %v452, %v616
        %v618 = vpop.f32.mrb[0].mxu0
        %v619 = vadd.f32 %v456, %v618
        %620 = vdwg.mxu0
        %621 = vmatprep.subr.bf16.mxu0 %v512
        %622 = vmatpush1.bf16.msra.mxu0 %v511
        %623 = vmatprep.subr.bf16.mxu0 %v518
        %624 = vmatpush1.bf16.msra.mxu0 %v517
        %625 = vmatprep.subr.bf16.mxu0 0
        %626 = vmatpush1.bf16.msra.mxu0 0
        %627 = vmatprep.subr.bf16.mxu0 0
        %628 = vmatpush1.bf16.msra.mxu0 0
        %629 = vmatprep.subr.bf16.mxu0 0
        %630 = vmatpush1.bf16.msra.mxu0 0
        %631 = vmatprep.subr.bf16.mxu0 0
        %632 = vmatpush1.bf16.msra.mxu0 0
        %633 = vmatprep.subr.bf16.mxu0 0
        %634 = vmatpush1.bf16.msra.mxu0 0
        %635 = vmatprep.subr.bf16.mxu0 0
        %636 = vmatpush1.bf16.msra.mxu0 0
        %637 = vmatprep.subr.bf16.mxu0 0
        %638 = vmatpush1.bf16.msra.mxu0 0
        %639 = vmatprep.subr.bf16.mxu0 0
        %640 = vmatpush1.bf16.msra.mxu0 0
        %641 = vmatprep.subr.bf16.mxu0 0
        %642 = vmatpush1.bf16.msra.mxu0 0
        %643 = vmatprep.subr.bf16.mxu0 0
        %644 = vmatpush1.bf16.msra.mxu0 0
        %645 = vmatprep.subr.bf16.mxu0 0
        %646 = vmatpush1.bf16.msra.mxu0 0
        %647 = vmatprep.subr.bf16.mxu0 0
        %648 = vmatpush1.bf16.msra.mxu0 0
        %649 = vmatprep.subr.bf16.mxu0 0
        %650 = vmatpush1.bf16.msra.mxu0 0
        %651 = vmatprep.subr.bf16.mxu0 0
        %652 = vmatpush1.bf16.msra.mxu0 0
        %653 = vmatprep.mubr.bf16.mxu0 0
        %654 = vmatmul.mubr.bf16.gmra.mrb[0].mxu0 %v533
        %v655 = vpop.f32.mrb[0].mxu0
        %v656 = vadd.f32 %v460, %v655
        %v657 = vpop.f32.mrb[0].mxu0
        %v658 = vadd.f32 %v464, %v657
        %v659 = vpop.f32.mrb[0].mxu0
        %v660 = vadd.f32 %v460, %v659
        %v661 = vpop.f32.mrb[0].mxu0
        %v662 = vadd.f32 %v464, %v661
        %663 = vdwg.mxu0
        %v664 = vld [vmem:[%s359] sm:$0xff]
        %v665 = vld [vmem:[%s359 + $0x8] sm:$0xff]
        %v666 = vld [vmem:[%s368] sm:$0xff]
        %v667 = vld [vmem:[%s368 + $0x8] sm:$0xff]
        %v668 = vld [vmem:[%s377] sm:$0xff]
        %v669 = vld [vmem:[%s377 + $0x8] sm:$0xff]
        %v670 = vld [vmem:[%s6] sm:$0xff]
        %v671 = vld [vmem:[%s6 + $0x8] sm:$0xff]
        %v672 = vmul.f32 %v570, %v664
        %v673 = vmul.f32 %v574, %v665
        %674 = vrot.lane.b32.xlu0 %v570, 96
        %v675 = vpop.permute.xlu0 %674
        %676 = vrot.lane.b32.xlu0 %v574, 96
        %v677 = vpop.permute.xlu0 %676
        %v678 = vmul.f32 %v675, %v666
        %v679 = vmul.f32 %v677, %v667
        %v680 = vadd.f32 %v672, %v678
        %v681 = vadd.f32 %v673, %v679
        %682 = vrot.lane.b32.xlu0 %v570, 32
        %v683 = vpop.permute.xlu0 %682
        %684 = vrot.lane.b32.xlu0 %v574, 32
        %v685 = vpop.permute.xlu0 %684
        %v686 = vmul.f32 %v683, %v668
        %v687 = vmul.f32 %v685, %v669
        %v688 = vadd.f32 %v680, %v686
        %v689 = vadd.f32 %v681, %v687
        %v690 = vmul.f32 %v613, %v664
        %v691 = vmul.f32 %v617, %v665
        %692 = vrot.lane.b32.xlu0 %v613, 96
        %v693 = vpop.permute.xlu0 %692
        %694 = vrot.lane.b32.xlu0 %v617, 96
        %v695 = vpop.permute.xlu0 %694
        %v696 = vmul.f32 %v693, %v666
        %v697 = vmul.f32 %v695, %v667
        %v698 = vadd.f32 %v690, %v696
        %v699 = vadd.f32 %v691, %v697
        %700 = vrot.lane.b32.xlu0 %v613, 32
        %v701 = vpop.permute.xlu0 %700
        %702 = vrot.lane.b32.xlu0 %v617, 32
        %v703 = vpop.permute.xlu0 %702
        %v704 = vmul.f32 %v701, %v668
        %v705 = vmul.f32 %v703, %v669
        %v706 = vadd.f32 %v698, %v704
        %v707 = vadd.f32 %v699, %v705
        %v708 = vpack.c.bf16 %v689, %v688
        %v709 = vpack.c.bf16 %v707, %v706
        %710 = vmatprep.subr.bf16.mxu0 0
        %711 = vmatpush1.bf16.xpose.msra.mxu0 %v709
        %712 = vmatprep.subr.bf16.mxu0 0
        %713 = vmatpush1.bf16.xpose.msra.mxu0 0
        %714 = vmatprep.subr.bf16.mxu0 0
        %715 = vmatpush1.bf16.xpose.msra.mxu0 0
        %716 = vmatprep.subr.bf16.mxu0 0
        %717 = vmatpush1.bf16.xpose.msra.mxu0 0
        %718 = vmatprep.subr.bf16.mxu0 0
        %719 = vmatpush1.bf16.xpose.msra.mxu0 0
        %720 = vmatprep.subr.bf16.mxu0 0
        %721 = vmatpush1.bf16.xpose.msra.mxu0 0
        %722 = vmatprep.subr.bf16.mxu0 0
        %723 = vmatpush1.bf16.xpose.msra.mxu0 0
        %724 = vmatprep.subr.bf16.mxu0 0
        %725 = vmatpush1.bf16.xpose.msra.mxu0 0
        %726 = vmatprep.subr.bf16.mxu0 0
        %727 = vmatpush1.bf16.xpose.msra.mxu0 0
        %728 = vmatprep.subr.bf16.mxu0 0
        %729 = vmatpush1.bf16.xpose.msra.mxu0 0
        %730 = vmatprep.subr.bf16.mxu0 0
        %731 = vmatpush1.bf16.xpose.msra.mxu0 0
        %732 = vmatprep.subr.bf16.mxu0 0
        %733 = vmatpush1.bf16.xpose.msra.mxu0 0
        %734 = vmatprep.subr.bf16.mxu0 0
        %735 = vmatpush1.bf16.xpose.msra.mxu0 0
        %736 = vmatprep.subr.bf16.mxu0 0
        %737 = vmatpush1.bf16.xpose.msra.mxu0 0
        %738 = vmatprep.subr.bf16.mxu0 0
        %739 = vmatpush1.bf16.xpose.msra.mxu0 0
        %740 = vmatprep.subr.bf16.mxu0 0
        %741 = vmatpush1.bf16.xpose.msra.mxu0 0
        %742 = vmatprep.mubr.bf16.mxu0 0
        %743 = vmatmul.mubr.bf16.gmra.mrb[0].mxu0 %v708
        %v744 = vpop.f32.mrb[0].mxu0
        %v745 = vadd.f32 0.0, %v744
        %v746 = vpop.f32.mrb[0].mxu0
        %v747 = vpop.f32.mrb[0].mxu0
        %v748 = vadd.f32 0.0, %v747
        %v749 = vpop.f32.mrb[0].mxu0
        %750 = vdwg.mxu0
        %v751 = vmax.f32 %v745, -5.0
        %v752 = vmax.f32 %v748, -5.0
        %v753 = vmin.f32 %v751, 5.0
        %v754 = vmin.f32 %v752, 5.0
        %v755 = vmul.f32 %v753, 1.442695
        %v756 = vpow.pop %v755
        %v757 = vmul.f32 %v754, 1.442695
        %v758 = vpow.pop %v757
        %v759 = vmul.f32 %v756, %v670
        %v760 = vmul.f32 %v758, %v671
        %vm761 = vcmask 130048
        %v762 = vsel %vm761, %v759, 0.0
        %763 = vadd.xlane.f32.xlu0 %v762
        %v764 = vpop.xlane.xlu0 %763
        %v765 = vsel %vm761, %v760, 0.0
        %766 = vadd.xlane.f32.xlu0 %v765
        %v767 = vpop.xlane.xlu0 %766
        %v768 = vpack.c.bf16 %v760, %v759
        %v769 = vpack.c.bf16 %v660, %v656
        %v771 = vsel %vm761, %v768, 0
        %773 = vmatprep.subr.bf16.mxu0 0
        %774 = vmatpush1.bf16.msra.mxu0 %v769
        %775 = vmatprep.subr.bf16.mxu0 0
        %776 = vmatpush1.bf16.msra.mxu0 0
        %777 = vmatprep.subr.bf16.mxu0 0
        %778 = vmatpush1.bf16.msra.mxu0 0
        %779 = vmatprep.subr.bf16.mxu0 0
        %780 = vmatpush1.bf16.msra.mxu0 0
        %781 = vmatprep.subr.bf16.mxu0 0
        %782 = vmatpush1.bf16.msra.mxu0 0
        %783 = vmatprep.subr.bf16.mxu0 0
        %784 = vmatpush1.bf16.msra.mxu0 0
        %785 = vmatprep.subr.bf16.mxu0 0
        %786 = vmatpush1.bf16.msra.mxu0 0
        %787 = vmatprep.subr.bf16.mxu0 0
        %788 = vmatpush1.bf16.msra.mxu0 0
        %789 = vmatprep.subr.bf16.mxu0 0
        %790 = vmatpush1.bf16.msra.mxu0 0
        %791 = vmatprep.subr.bf16.mxu0 0
        %792 = vmatpush1.bf16.msra.mxu0 0
        %793 = vmatprep.subr.bf16.mxu0 0
        %794 = vmatpush1.bf16.msra.mxu0 0
        %795 = vmatprep.subr.bf16.mxu0 0
        %796 = vmatpush1.bf16.msra.mxu0 0
        %797 = vmatprep.subr.bf16.mxu0 0
        %798 = vmatpush1.bf16.msra.mxu0 0
        %799 = vmatprep.subr.bf16.mxu0 0
        %800 = vmatpush1.bf16.msra.mxu0 0
        %801 = vmatprep.subr.bf16.mxu0 0
        %802 = vmatpush1.bf16.msra.mxu0 0
        %803 = vmatprep.subr.bf16.mxu0 0
        %804 = vmatpush1.bf16.msra.mxu0 0
        %805 = vmatprep.mubr.bf16.mxu0 0
        %806 = vmatmul.mubr.bf16.gmra.mrb[0].mxu0 %v771
        %v807 = vpop.f32.mrb[0].mxu0
        %v808 = vadd.f32 0.0, %v807
        %v809 = vpop.f32.mrb[0].mxu0
        %v810 = vpop.f32.mrb[0].mxu0
        %v811 = vadd.f32 0.0, %v810
        %v812 = vpop.f32.mrb[0].mxu0
        %813 = vdwg.mxu0
        %v814 = vrcp.pop %v764
        %v815 = vrcp.pop %v767
        %v816 = vmul.f32 %v808, %v814
        %v817 = vmul.f32 %v811, %v815
        %v818 = vmul.f32 %v572, %v664
        %v819 = vmul.f32 %v576, %v665
        %820 = vrot.lane.b32.xlu0 %v572, 96
        %v821 = vpop.permute.xlu0 %820
        %822 = vrot.lane.b32.xlu0 %v576, 96
        %v823 = vpop.permute.xlu0 %822
        %v824 = vmul.f32 %v821, %v666
        %v825 = vmul.f32 %v823, %v667
        %v826 = vadd.f32 %v818, %v824
        %v827 = vadd.f32 %v819, %v825
        %828 = vrot.lane.b32.xlu0 %v572, 32
        %v829 = vpop.permute.xlu0 %828
        %830 = vrot.lane.b32.xlu0 %v576, 32
        %v831 = vpop.permute.xlu0 %830
        %v832 = vmul.f32 %v829, %v668
        %v833 = vmul.f32 %v831, %v669
        %v834 = vadd.f32 %v826, %v832
        %v835 = vadd.f32 %v827, %v833
        %v836 = vmul.f32 %v615, %v664
        %v837 = vmul.f32 %v619, %v665
        %838 = vrot.lane.b32.xlu0 %v615, 96
        %v839 = vpop.permute.xlu0 %838
        %840 = vrot.lane.b32.xlu0 %v619, 96
        %v841 = vpop.permute.xlu0 %840
        %v842 = vmul.f32 %v839, %v666
        %v843 = vmul.f32 %v841, %v667
        %v844 = vadd.f32 %v836, %v842
        %v845 = vadd.f32 %v837, %v843
        %846 = vrot.lane.b32.xlu0 %v615, 32
        %v847 = vpop.permute.xlu0 %846
        %848 = vrot.lane.b32.xlu0 %v619, 32
        %v849 = vpop.permute.xlu0 %848
        %v850 = vmul.f32 %v847, %v668
        %v851 = vmul.f32 %v849, %v669
        %v852 = vadd.f32 %v844, %v850
        %v853 = vadd.f32 %v845, %v851
        %v854 = vpack.c.bf16 %v835, %v834
        %v855 = vpack.c.bf16 %v853, %v852
        %856 = vmatprep.subr.bf16.mxu0 0
        %857 = vmatpush1.bf16.xpose.msra.mxu0 %v855
        %858 = vmatprep.subr.bf16.mxu0 0
        %859 = vmatpush1.bf16.xpose.msra.mxu0 0
        %860 = vmatprep.subr.bf16.mxu0 0
        %861 = vmatpush1.bf16.xpose.msra.mxu0 0
        %862 = vmatprep.subr.bf16.mxu0 0
        %863 = vmatpush1.bf16.xpose.msra.mxu0 0
        %864 = vmatprep.subr.bf16.mxu0 0
        %865 = vmatpush1.bf16.xpose.msra.mxu0 0
        %866 = vmatprep.subr.bf16.mxu0 0
        %867 = vmatpush1.bf16.xpose.msra.mxu0 0
        %868 = vmatprep.subr.bf16.mxu0 0
        %869 = vmatpush1.bf16.xpose.msra.mxu0 0
        %870 = vmatprep.subr.bf16.mxu0 0
        %871 = vmatpush1.bf16.xpose.msra.mxu0 0
        %872 = vmatprep.subr.bf16.mxu0 0
        %873 = vmatpush1.bf16.xpose.msra.mxu0 0
        %874 = vmatprep.subr.bf16.mxu0 0
        %875 = vmatpush1.bf16.xpose.msra.mxu0 0
        %876 = vmatprep.subr.bf16.mxu0 0
        %877 = vmatpush1.bf16.xpose.msra.mxu0 0
        %878 = vmatprep.subr.bf16.mxu0 0
        %879 = vmatpush1.bf16.xpose.msra.mxu0 0
        %880 = vmatprep.subr.bf16.mxu0 0
        %881 = vmatpush1.bf16.xpose.msra.mxu0 0
        %882 = vmatprep.subr.bf16.mxu0 0
        %883 = vmatpush1.bf16.xpose.msra.mxu0 0
        %884 = vmatprep.subr.bf16.mxu0 0
        %885 = vmatpush1.bf16.xpose.msra.mxu0 0
        %886 = vmatprep.subr.bf16.mxu0 0
        %887 = vmatpush1.bf16.xpose.msra.mxu0 0
        %888 = vmatprep.mubr.bf16.mxu0 0
        %889 = vmatmul.mubr.bf16.gmra.mrb[0].mxu0 %v854
        %v890 = vpop.f32.mrb[0].mxu0
        %v891 = vadd.f32 0.0, %v890
        %v892 = vpop.f32.mrb[0].mxu0
        %v893 = vpop.f32.mrb[0].mxu0
        %v894 = vadd.f32 0.0, %v893
        %v895 = vpop.f32.mrb[0].mxu0
        %896 = vdwg.mxu0
        %v897 = vmax.f32 %v891, -5.0
        %v898 = vmax.f32 %v894, -5.0
        %v899 = vmin.f32 %v897, 5.0
        %v900 = vmin.f32 %v898, 5.0
        %v901 = vmul.f32 %v899, 1.442695
        %v902 = vpow.pop %v901
        %v903 = vmul.f32 %v900, 1.442695
        %v904 = vpow.pop %v903
        %v905 = vmul.f32 %v902, %v670
        %v906 = vmul.f32 %v904, %v671
        %v907 = vsel %vm761, %v905, 0.0
        %908 = vadd.xlane.f32.xlu0 %v907
        %v909 = vpop.xlane.xlu0 %908
        %v910 = vsel %vm761, %v906, 0.0
        %911 = vadd.xlane.f32.xlu0 %v910
        %v912 = vpop.xlane.xlu0 %911
        %v913 = vpack.c.bf16 %v906, %v905
        %v914 = vpack.c.bf16 %v662, %v658
        %v916 = vsel %vm761, %v913, 0
        %918 = vmatprep.subr.bf16.mxu0 0
        %919 = vmatpush1.bf16.msra.mxu0 %v914
        %920 = vmatprep.subr.bf16.mxu0 0
        %921 = vmatpush1.bf16.msra.mxu0 0
        %922 = vmatprep.subr.bf16.mxu0 0
        %923 = vmatpush1.bf16.msra.mxu0 0
        %924 = vmatprep.subr.bf16.mxu0 0
        %925 = vmatpush1.bf16.msra.mxu0 0
        %926 = vmatprep.subr.bf16.mxu0 0
        %927 = vmatpush1.bf16.msra.mxu0 0
        %928 = vmatprep.subr.bf16.mxu0 0
        %929 = vmatpush1.bf16.msra.mxu0 0
        %930 = vmatprep.subr.bf16.mxu0 0
        %931 = vmatpush1.bf16.msra.mxu0 0
        %932 = vmatprep.subr.bf16.mxu0 0
        %933 = vmatpush1.bf16.msra.mxu0 0
        %934 = vmatprep.subr.bf16.mxu0 0
        %935 = vmatpush1.bf16.msra.mxu0 0
        %936 = vmatprep.subr.bf16.mxu0 0
        %937 = vmatpush1.bf16.msra.mxu0 0
        %938 = vmatprep.subr.bf16.mxu0 0
        %939 = vmatpush1.bf16.msra.mxu0 0
        %940 = vmatprep.subr.bf16.mxu0 0
        %941 = vmatpush1.bf16.msra.mxu0 0
        %942 = vmatprep.subr.bf16.mxu0 0
        %943 = vmatpush1.bf16.msra.mxu0 0
        %944 = vmatprep.subr.bf16.mxu0 0
        %945 = vmatpush1.bf16.msra.mxu0 0
        %946 = vmatprep.subr.bf16.mxu0 0
        %947 = vmatpush1.bf16.msra.mxu0 0
        %948 = vmatprep.subr.bf16.mxu0 0
        %949 = vmatpush1.bf16.msra.mxu0 0
        %950 = vmatprep.mubr.bf16.mxu0 0
        %951 = vmatmul.mubr.bf16.gmra.mrb[0].mxu0 %v916
        %v952 = vpop.f32.mrb[0].mxu0
        %v953 = vadd.f32 0.0, %v952
        %v954 = vpop.f32.mrb[0].mxu0
        %v955 = vpop.f32.mrb[0].mxu0
        %v956 = vadd.f32 0.0, %v955
        %v957 = vpop.f32.mrb[0].mxu0
        %958 = vdwg.mxu0
        %v959 = vrcp.pop %v909
        %v960 = vrcp.pop %v912
        %v961 = vmul.f32 %v953, %v959
        %v962 = vmul.f32 %v956, %v960
        %963 = vst [vmem:[%s422] sm:$0xff] %v816
        %964 = vst [vmem:[%s422 + $0x8] sm:$0xff] %v961
        %965 = vst [vmem:[%s422 + $0x10] sm:$0xff] %v817
        %966 = vst [vmem:[%s422 + $0x18] sm:$0xff] %v962
        %s967 = sand.u32 %s200, 1
        %s968 = scalar_lea.sflag [#allocation4], %s967
        %s969 = sand.u32 %s200, 1
        %s970 = smul.addr %s969, 32
        %s971 = scalar_lea.vmem [#allocation10], %s970
        // Predicated region
        $region69: #{tpu_custom_call.1} parent=47 // pred_check
          %p972 = pneg %p210
        $region70: #{tpu_custom_call.1} parent=47 // pred_check_branch
          %974 = sbr.rel (%p972) target = $region72
        $region71: #{tpu_custom_call.1} parent=47 // pred_region
          %s976 = ssub.s32 512, 512
          %977 = vsyncadd %s968, %s976
          %s978 = smul.addr %s25, 4
          %s979 = smul.addr %s978, 128
          %s980 = scalar_lea.hbm %s7, %s979
          %s981 = sshll.u32 %s971, 4
          %s982 = int_to_ptr.vmem [resolvable:$true] %s981
          %987 = dma.vmem_to_hbm [thread:$0]  %s982, 512, %s980, %s968, 256, 256, 16
        $region72: #{tpu_custom_call.1} parent=47 // pred_fallthru
          _
      $region48: #{tpu_custom_call.1} parent=5 // pred_fallthru
        _
      %p988 = scmp.le.s32.totalorder 2, %s20
      // Predicated region
      $region73: #{tpu_custom_call.1} parent=5 // pred_check
        %p989 = pneg %p988
      $region74: #{tpu_custom_call.1} parent=5 // pred_check_branch
        %991 = sbr.rel (%p989) target = $region76
      $region75: #{tpu_custom_call.1} parent=5 // pred_region
        %s992 = ssub.s32 %s20, 2
        // Predicated region
        $region77: #{tpu_custom_call.1} parent=75 // pred_check
          %p993 = pneg %p216
        $region78: #{tpu_custom_call.1} parent=75 // pred_check_branch
          %995 = sbr.rel (%p993) target = $region80
        $region79: #{tpu_custom_call.1} parent=75 // pred_region
          %s996 = sand.u32 %s201, 1
          %s997 = scalar_lea.sflag [#allocation4], %s996
          %s998 = sand.u32 %s201, 1
          %s999 = smul.addr %s998, 32
          %s1000 = scalar_lea.vmem [#allocation10], %s999
          %1001 = dma.done %s997, 512
        $region80: #{tpu_custom_call.1} parent=75 // pred_fallthru
          _
      $region76: #{tpu_custom_call.1} parent=5 // pred_fallthru
        _
    $region6: #{tpu_custom_call.1} parent=1 // loop_footer
      %s24 = sadd.s32 1, %s20
    $region7: #{tpu_custom_call.1} parent=1 // loop_footer_branch
      %19 = sbr.rel target = $region3
    $region8: #{tpu_custom_call.1} parent=1 // loop_exit
      _
    %1002 = vsyncpa [#allocation3], 1
    %s1003 = scalar_lea.sflag [#allocation3], 1
    %1004 = vsyncpa %s1003, 1
    %1005 = vsyncpa [#allocation6], 1
    %1006 = vsyncpa [#allocation4], 1
    %s1007 = scalar_lea.sflag [#allocation4], 1
    %1008 = vsyncpa %s1007, 1

</llo_original>
